<compile_context>
chip_gen: v6e
topology: v6e:2x2x1
jax: 0.10.0
libtpu: 0.0.40
codegen_flags: <defaults>
</compile_context>

<pallas_src>
import functools
import math

import jax
import jax.numpy as jnp
from jax.experimental import pallas as pl
from jax.experimental.pallas import tpu as pltpu


def mlp_kernel(x_ref, w1_ref, b1_ref, w2_ref, b2_ref, o_ref):
    # x: (TB, 30) | w1: (4, 30) torch (out,in) layout | b1: (4,1) | w2: (4,1) | b2: (1,1)
    # Layer 1 on the MXU with batch on the LANE axis of the result:
    #   h[o, b] = sum_i w1[o, i] * x[b, i]
    # Same rhs-minor-contracted pattern as flash-attention QK^T -> native transposed-RHS
    # matmul, no XLU transpose of the big x block.
    h = jnp.einsum("oi,bi->ob", w1_ref[...], x_ref[...],
                   preferred_element_type=jnp.float32)            # (4, TB) f32
    h = jnp.maximum(h + b1_ref[...], 0.0)                          # bias broadcasts across lanes

    # Layer 2 on the VPU plus a cheap 4-sublane reduction (XLU slot); result stays
    # lane-dense so the store is a full-lane write.
    y = jnp.sum(h * w2_ref[...], axis=0, keepdims=True) + b2_ref[...]   # (1, TB)
    o_ref[...] = jnp.maximum(y, 0.0).astype(o_ref.dtype)


def _round_up(n, m):
    return ((n + m - 1) // m) * m


@functools.partial(jax.jit, static_argnames=("block_rows",))
def simple_mlp_forward(x, w1, b1, w2, b2, *, block_rows=16384):
    """Fused SimpleMLP forward.

    x:  (B, 30) float32 (or bfloat16 for a halved-HBM-traffic path)
    w1: (4, 30), b1: (4,)   -- torch nn.Linear(30, 4) layout
    w2: (1, 4),  b2: (1,)   -- torch nn.Linear(4, 1) layout
    returns (B, 1) float32
    """
    B, F = x.shape
    assert F == 30, "SimpleMLP expects 30 input features"

    # Default fp32 (exact match to the fp32 torch reference).  A caller-supplied bf16
    # x is used as-is (no wrapper cast copy); accumulation stays f32 in the kernel.
    if x.dtype not in (jnp.float32, jnp.bfloat16):
        x = x.astype(jnp.float32)

    # Tiny parameters: VMEM-resident for the whole grid.
    w1k = w1.reshape(4, 30).astype(x.dtype)
    b1k = b1.reshape(4, 1).astype(jnp.float32)
    w2k = w2.reshape(4, 1).astype(jnp.float32)
    b2k = b2.reshape(1, 1).astype(jnp.float32)

    # Batch tile: large (bandwidth-bound kernel), multiple of 128 when the batch spans
    # several tiles; a single full-extent tile otherwise.  No jnp.pad: grid uses cdiv
    # and the boundary block is partial (garbage rows only reach masked-off lanes).
    tb_target = max(128, _round_up(int(block_rows), 128))
    tb = B if B <= tb_target else tb_target
    num_tiles = pl.cdiv(B, tb)

    # Scoped-VMEM budget: the (tb, 30) block is lane-padded to 128 lanes in VMEM and
    # double-buffered; v5e's default scoped limit is only 16 MiB, so size it explicitly.
    itemsize = jnp.dtype(x.dtype).itemsize
    x_block_bytes = _round_up(tb, 8) * 128 * itemsize
    vmem_limit = 2 * x_block_bytes + 2 * _round_up(tb, 128) * 4 + (4 << 20)
    vmem_limit = int(max(vmem_limit, 16 << 20))

    n_param = w1k.size + b1k.size + w2k.size + b2k.size
    cost = pl.CostEstimate(
        flops=int(2 * B * 30 * 4 + 2 * B * 4),
        transcendentals=0,
        bytes_accessed=int(x.size * itemsize + B * 4 + n_param * 4),
    )

    out = pl.pallas_call(
        mlp_kernel,
        out_shape=jax.ShapeDtypeStruct((1, B), jnp.float32),
        grid=(num_tiles,),
        in_specs=[
            pl.BlockSpec((tb, 30), lambda i: (i, 0)),    # x: streamed per batch tile
            pl.BlockSpec((4, 30), lambda i: (0, 0)),     # params: constant index maps
            pl.BlockSpec((4, 1), lambda i: (0, 0)),
            pl.BlockSpec((4, 1), lambda i: (0, 0)),
            pl.BlockSpec((1, 1), lambda i: (0, 0)),
        ],
        # Lane-dense output row; sublane block dim (1) == full array dim, so the
        # (8,128)/full-dim rule is satisfied for any num_tiles.
        out_specs=pl.BlockSpec((1, tb), lambda i: (0, i)),
        compiler_params=pltpu.CompilerParams(
            dimension_semantics=("parallel",),   # v7x: both TCs split batch tiles
            vmem_limit_bytes=vmem_limit,
        ),
        cost_estimate=cost,
    )(x, w1k, b1k, w2k, b2k)

    return out.reshape(B, 1)


def kaiming_uniform(key, fan_out, fan_in, dtype=jnp.float32):
    # Matches torch.nn.init.kaiming_uniform_ defaults: a=0 -> gain=sqrt(2),
    # bound = gain * sqrt(3 / fan_in). Torch weight layout is (out, in).
    bound = math.sqrt(2.0) * math.sqrt(3.0 / fan_in)
    return jax.random.uniform(key, (fan_out, fan_in), dtype, minval=-bound, maxval=bound)


if __name__ == "__main__":
    key = jax.random.PRNGKey(0)
    kx, kx2, k1, k2 = jax.random.split(key, 4)

    # Deterministic torch-layout parameters (kaiming-uniform weights, zero biases).
    w1 = kaiming_uniform(k1, 4, 30)          # (out=4, in=30)
    w2 = kaiming_uniform(k2, 1, 4)           # (out=1, in=4)
    b1 = jnp.zeros((4,), jnp.float32)
    b2 = jnp.zeros((1,), jnp.float32)

    def ref_forward(xin):
        h = jnp.maximum(xin @ w1.T + b1, 0.0)
        return jnp.maximum(h @ w2.T + b2, 0.0)

    # Small demo batch (single full-extent tile).
    x = jax.random.normal(kx, (8, 30), jnp.float32)
    out = jax.block_until_ready(simple_mlp_forward(x, w1, b1, w2, b2))
    assert out.shape == (8, 1)
    assert jnp.allclose(out, ref_forward(x), atol=1e-5, rtol=1e-5), "mismatch (B=8)"

    # Ragged multi-tile batch with a small tile: exercises the partial boundary block
    # (no padding copy -- out-of-range lanes are masked on the store).
    x2 = jax.random.normal(kx2, (300, 30), jnp.float32)
    out2 = jax.block_until_ready(
        simple_mlp_forward(x2, w1, b1, w2, b2, block_rows=128))
    assert out2.shape == (300, 1)
    assert jnp.allclose(out2, ref_forward(x2), atol=1e-5, rtol=1e-5), "mismatch (B=300)"

    print("KERNEL_OK")
</pallas_src>

<mosaic_0001>
module attributes {stable_mosaic.version = 11 : i64} {
  func.func @mlp_kernel(%arg0: i32, %arg1: memref<8x30xf32, #tpu.memory_space<vmem>>, %arg2: memref<4x30xf32, #tpu.memory_space<vmem>>, %arg3: memref<4x1xf32, #tpu.memory_space<vmem>>, %arg4: memref<4x1xf32, #tpu.memory_space<vmem>>, %arg5: memref<1x1xf32, #tpu.memory_space<vmem>>, %arg6: memref<1x8xf32, #tpu.memory_space<vmem>>) attributes {dimension_semantics = [#tpu.dimension_semantics<parallel>], iteration_bounds = array<i64: 1>, scalar_prefetch = 0 : i64, scratch_operands = 0 : i64, tpu.core_type = #tpu.core_type<tc>, window_params = [{transform_indices = @transform_0, window_bounds = array<i64: 8, 30>}, {pipeline_mode = #tpu.pipeline_mode<synchronous>, transform_indices = @transform_1, window_bounds = array<i64: 4, 30>}, {pipeline_mode = #tpu.pipeline_mode<synchronous>, transform_indices = @transform_2, window_bounds = array<i64: 4, 1>}, {pipeline_mode = #tpu.pipeline_mode<synchronous>, transform_indices = @transform_3, window_bounds = array<i64: 4, 1>}, {pipeline_mode = #tpu.pipeline_mode<synchronous>, transform_indices = @transform_4, window_bounds = array<i64: 1, 1>}, {transform_indices = @transform_5, window_bounds = array<i64: 1, 8>}]} {
    %c0 = arith.constant 0 : index
    %c0_0 = arith.constant 0 : index
    %0 = vector.load %arg2[%c0, %c0_0] : memref<4x30xf32, #tpu.memory_space<vmem>>, vector<4x30xf32>
    %c0_1 = arith.constant 0 : index
    %c0_2 = arith.constant 0 : index
    %1 = vector.load %arg1[%c0_1, %c0_2] : memref<8x30xf32, #tpu.memory_space<vmem>>, vector<8x30xf32>
    "tpu.trace_start"() <{level = 10 : i32, message = "oi,bi->ob"}> : () -> ()
    %cst = arith.constant dense<0.000000e+00> : vector<4x8xf32>
    %2 = tpu.matmul %0, %1, %cst {dimension_numbers = #tpu.dot_dimension_numbers<[1], [1], [0], [0], [0, 0, 1, 0], [], []>} : vector<4x30xf32>, vector<8x30xf32>, vector<4x8xf32> -> vector<4x8xf32>
    "tpu.trace_stop"() : () -> ()
    %c0_3 = arith.constant 0 : index
    %c0_4 = arith.constant 0 : index
    %3 = vector.load %arg3[%c0_3, %c0_4] : memref<4x1xf32, #tpu.memory_space<vmem>>, vector<4x1xf32>
    %4 = vector.broadcast %3 : vector<4x1xf32> to vector<4x8xf32>
    %5 = arith.addf %2, %4 : vector<4x8xf32>
    %cst_5 = arith.constant 0.000000e+00 : f32
    %6 = vector.broadcast %cst_5 : f32 to vector<4x8xf32>
    %7 = arith.maximumf %5, %6 : vector<4x8xf32>
    %c0_6 = arith.constant 0 : index
    %c0_7 = arith.constant 0 : index
    %8 = vector.load %arg4[%c0_6, %c0_7] : memref<4x1xf32, #tpu.memory_space<vmem>>, vector<4x1xf32>
    %9 = vector.broadcast %8 : vector<4x1xf32> to vector<4x8xf32>
    %10 = arith.mulf %7, %9 : vector<4x8xf32>
    %cst_8 = arith.constant dense<0.000000e+00> : vector<8xf32>
    %11 = vector.multi_reduction <add>, %10, %cst_8 [0] : vector<4x8xf32> to vector<8xf32>
    %12 = vector.shape_cast %11 : vector<8xf32> to vector<1x8xf32>
    %c0_9 = arith.constant 0 : index
    %c0_10 = arith.constant 0 : index
    %13 = vector.load %arg5[%c0_9, %c0_10] : memref<1x1xf32, #tpu.memory_space<vmem>>, vector<1x1xf32>
    %14 = vector.broadcast %13 : vector<1x1xf32> to vector<1x8xf32>
    %15 = arith.addf %12, %14 : vector<1x8xf32>
    %cst_11 = arith.constant 0.000000e+00 : f32
    %16 = vector.broadcast %cst_11 : f32 to vector<1x8xf32>
    %17 = arith.maximumf %15, %16 : vector<1x8xf32>
    %c0_12 = arith.constant 0 : index
    %c0_13 = arith.constant 0 : index
    %18 = vector.load %arg6[%c0_12, %c0_13] : memref<1x8xf32, #tpu.memory_space<vmem>>, vector<1x8xf32>
    tpu.vector_store %arg6[%c0_12, %c0_13], %17 {strides = array<i32>} : memref<1x8xf32, #tpu.memory_space<vmem>>, vector<1x8xf32>,
    return
  }
  func.func @transform_0(%arg0: i32) -> (i32, i32) {
    %c0_i32 = arith.constant 0 : i32
    %c0_i32_0 = arith.constant 0 : i32
    return %arg0, %c0_i32 : i32, i32
  }
  func.func @transform_1(%arg0: i32) -> (i32, i32) {
    %c0_i32 = arith.constant 0 : i32
    %c0_i32_0 = arith.constant 0 : i32
    %c0_i32_1 = arith.constant 0 : i32
    return %c0_i32, %c0_i32_0 : i32, i32
  }
  func.func @transform_2(%arg0: i32) -> (i32, i32) {
    %c0_i32 = arith.constant 0 : i32
    %c0_i32_0 = arith.constant 0 : i32
    %c0_i32_1 = arith.constant 0 : i32
    return %c0_i32, %c0_i32_0 : i32, i32
  }
  func.func @transform_3(%arg0: i32) -> (i32, i32) {
    %c0_i32 = arith.constant 0 : i32
    %c0_i32_0 = arith.constant 0 : i32
    %c0_i32_1 = arith.constant 0 : i32
    return %c0_i32, %c0_i32_0 : i32, i32
  }
  func.func @transform_4(%arg0: i32) -> (i32, i32) {
    %c0_i32 = arith.constant 0 : i32
    %c0_i32_0 = arith.constant 0 : i32
    %c0_i32_1 = arith.constant 0 : i32
    return %c0_i32, %c0_i32_0 : i32, i32
  }
  func.func @transform_5(%arg0: i32) -> (i32, i32) {
    %c0_i32 = arith.constant 0 : i32
    %c0_i32_0 = arith.constant 0 : i32
    return %c0_i32, %arg0 : i32, i32
  }
}

</mosaic_0001>

<llo_original>
// kernel: simple_mlp_forward.1
$region0: #{simple_mlp_forward.1}
  #allocation0 [shape = 'u32[]', space=smem, size = 0x4, offset = 0x4, fixed_abs, tag = 'smem constant byte address 0x4 - core index']
  #allocation1 [shape = 'u32[144,128]{1,0:T(1,128)}', space=vmem, size = 0x12000, scoped, tag = 'internal scratch']
  #allocation2 [shape = 'f32[1,1]{1,0:T(1,128)S(1)}', space=vmem, size = 0x200, scoped, tag = 'scoped memory for simple_mlp_forward.1']
  %s0 = inlined_call_operand.vmem [shape: f32[8,30], index: 0, kind: input, shape index: {}]
  %s1 = inlined_call_operand.vmem [shape: f32[4,30], index: 1, kind: input, shape index: {}]
  %s2 = inlined_call_operand.vmem [shape: f32[4,1], index: 2, kind: input, shape index: {}]
  %s3 = inlined_call_operand.vmem [shape: f32[4,1], index: 3, kind: input, shape index: {}]
  %s4 = inlined_call_operand.<no memory space> [shape: f32[1,1], index: 4, kind: input, shape index: {}]
  %s5 = inlined_call_operand.hbm [shape: f32[1,8], index: 5, kind: output, shape index: {}]
  %s6 = sld [smem:[#allocation0]]
  $region30: #{simple_mlp_forward.1} parent=0
    _
  %s8 = ssub.s32 1, %s6
  %s9 = scalar_select 0, %s8, %s6
  %v10 = vstv %s4
  %11 = vst [vmem:[#allocation2] sm:$0x1] %v10
  $region1: #{simple_mlp_forward.1} parent=0
    #allocation3 [shape = 'u8[512]{0}', space=vmem, size = 0x400, scoped, tag = 'output window, operand 0, single buffered']
    #allocation4 [shape = 's32[1]{0}', space=sflag, size = 0x4, scoped, tag = 'scoped memory for simple_mlp_forward.1']
    %12 = vsyncpa [#allocation4], 0
    // Predicated region
    $region2: #{simple_mlp_forward.1} parent=1 // pred_check
      _
    $region3: #{simple_mlp_forward.1} parent=1 // pred_check_branch
      %14 = sbr.rel (0) target = $region5
    $region4: #{simple_mlp_forward.1} parent=1 // pred_region
      _
    $region5: #{simple_mlp_forward.1} parent=1 // pred_fallthru
      _
    // Predicated region
    $region6: #{simple_mlp_forward.1} parent=1 // pred_check
      _
    $region7: #{simple_mlp_forward.1} parent=1 // pred_check_branch
      %16 = sbr.rel (0) target = $region9
    $region8: #{simple_mlp_forward.1} parent=1 // pred_region
      _
    $region9: #{simple_mlp_forward.1} parent=1 // pred_fallthru
      _
    // Predicated region
    $region10: #{simple_mlp_forward.1} parent=1 // pred_check
      _
    $region11: #{simple_mlp_forward.1} parent=1 // pred_check_branch
      %18 = sbr.rel (0) target = $region13
    $region12: #{simple_mlp_forward.1} parent=1 // pred_region
      _
    $region13: #{simple_mlp_forward.1} parent=1 // pred_fallthru
      _
    // Predicated region
    $region14: #{simple_mlp_forward.1} parent=1 // pred_check
      _
    $region15: #{simple_mlp_forward.1} parent=1 // pred_check_branch
      %20 = sbr.rel (0) target = $region17
    $region16: #{simple_mlp_forward.1} parent=1 // pred_region
      _
    $region17: #{simple_mlp_forward.1} parent=1 // pred_fallthru
      _
    // Predicated region
    $region18: #{simple_mlp_forward.1} parent=1 // pred_check
      _
    $region19: #{simple_mlp_forward.1} parent=1 // pred_check_branch
      %22 = sbr.rel (0) target = $region21
    $region20: #{simple_mlp_forward.1} parent=1 // pred_region
      _
    $region21: #{simple_mlp_forward.1} parent=1 // pred_fallthru
      _
    %v23 = vld [vmem:[%s1] sm:$0xf]
    %v24 = vld [vmem:[%s0] sm:$0xff]
    %v25 = vld [vmem:[%s2] sm:$0xf]
    %27 = vset.pattern.permute.xlu0 0
    %28 = vperm.xlu0 %27, %v25
    %v29 = vpop.permute.xlu0 %28
    %vm31 = vcmask 244736
    %v33 = vsel %vm31, %v23, 0
    %v36 = vsel %vm31, %v24, 0
    %38 = vmatprep.subr.mxu0 0.0
    %39 = vmatpush1.xpose.msra.mxu0 0.0
    %40 = vmatprep.subr.mxu0 0.0
    %41 = vmatpush1.xpose.msra.mxu0 0.0
    %42 = vmatprep.subr.mxu0 0.0
    %43 = vmatpush1.xpose.msra.mxu0 0.0
    %44 = vmatprep.subr.mxu0 0.0
    %45 = vmatpush1.xpose.msra.mxu0 0.0
    %46 = vmatprep.subr.mxu0 0.0
    %47 = vmatpush1.xpose.msra.mxu0 0.0
    %48 = vmatprep.subr.mxu0 0.0
    %49 = vmatpush1.xpose.msra.mxu0 0.0
    %50 = vmatprep.subr.mxu0 0.0
    %51 = vmatpush1.xpose.msra.mxu0 0.0
    %52 = vmatprep.subr.mxu0 0.0
    %53 = vmatpush1.xpose.msra.mxu0 0.0
    %54 = vmatprep.subr.mxu0 0.0
    %55 = vmatpush1.xpose.msra.mxu0 0.0
    %56 = vmatprep.subr.mxu0 0.0
    %57 = vmatpush1.xpose.msra.mxu0 0.0
    %58 = vmatprep.subr.mxu0 0.0
    %59 = vmatpush1.xpose.msra.mxu0 0.0
    %60 = vmatprep.subr.mxu0 0.0
    %61 = vmatpush1.xpose.msra.mxu0 0.0
    %62 = vmatprep.subr.mxu0 0.0
    %63 = vmatpush1.xpose.msra.mxu0 0.0
    %64 = vmatprep.subr.mxu0 0.0
    %65 = vmatpush1.xpose.msra.mxu0 0.0
    %66 = vmatprep.subr.mxu0 0.0
    %67 = vmatpush1.xpose.msra.mxu0 0.0
    %68 = vmatprep.subr.mxu0 0.0
    %69 = vmatpush1.xpose.msra.mxu0 %v36
    %70 = vmatprep.subr.mxu0 0.0
    %71 = vmatpush2.xpose.msra.mxu0 0.0
    %72 = vmatprep.subr.mxu0 0.0
    %73 = vmatpush2.xpose.msra.mxu0 0.0
    %74 = vmatprep.subr.mxu0 0.0
    %75 = vmatpush2.xpose.msra.mxu0 0.0
    %76 = vmatprep.subr.mxu0 0.0
    %77 = vmatpush2.xpose.msra.mxu0 0.0
    %78 = vmatprep.subr.mxu0 0.0
    %79 = vmatpush2.xpose.msra.mxu0 0.0
    %80 = vmatprep.subr.mxu0 0.0
    %81 = vmatpush2.xpose.msra.mxu0 0.0
    %82 = vmatprep.subr.mxu0 0.0
    %83 = vmatpush2.xpose.msra.mxu0 0.0
    %84 = vmatprep.subr.mxu0 0.0
    %85 = vmatpush2.xpose.msra.mxu0 0.0
    %86 = vmatprep.subr.mxu0 0.0
    %87 = vmatpush2.xpose.msra.mxu0 0.0
    %88 = vmatprep.subr.mxu0 0.0
    %89 = vmatpush2.xpose.msra.mxu0 0.0
    %90 = vmatprep.subr.mxu0 0.0
    %91 = vmatpush2.xpose.msra.mxu0 0.0
    %92 = vmatprep.subr.mxu0 0.0
    %93 = vmatpush2.xpose.msra.mxu0 0.0
    %94 = vmatprep.subr.mxu0 0.0
    %95 = vmatpush2.xpose.msra.mxu0 0.0
    %96 = vmatprep.subr.mxu0 0.0
    %97 = vmatpush2.xpose.msra.mxu0 0.0
    %98 = vmatprep.subr.mxu0 0.0
    %99 = vmatpush2.xpose.msra.mxu0 0.0
    %100 = vmatprep.subr.mxu0 0.0
    %101 = vmatpush2.xpose.msra.mxu0 0.0
    %102 = vmatprep.mubr.f32.mxu0 0.0
    %103 = vmatmul.mubr.f32.gmra.mxu0 %v33
    %v104 = vpop.f32.mrf.mxu0
    %v105 = vadd.f32 %v29, %v104
    %v106 = vpop.f32.mrf.mxu0
    %107 = vdwg.mxu0
    %v108 = vmax.f32 %v105, 0.0
    %v109 = vld [vmem:[%s3] sm:$0xf]
    %111 = vset.pattern.permute.xlu0 0
    %112 = vperm.xlu0 %111, %v109
    %v113 = vpop.permute.xlu0 %112
    %v115 = vmul.f32 %v108, %v113
    %vm116 = vcmask 60416
    %v117 = vsel %vm116, %v115, 0.0
    %v118 = vrot.slane %v117, 4
    %v119 = vadd.f32 %v117, %v118
    %v120 = vrot.slane %v119, 2
    %v121 = vadd.f32 %v119, %v120
    %v122 = vrot.slane %v121, 1
    %v123 = vadd.f32 %v121, %v122
    %v124 = vld [vmem:[#allocation2] sm:$0x1]
    %126 = vset.pattern.permute.xlu0 0
    %127 = vperm.xlu0 %126, %v124
    %v128 = vpop.permute.xlu0 %127
    %v130 = vlaneseq
    %v131 = vshrl.u32 %v130, 7
    %v132 = vsub.s32 0, %v131
    %v133 = vrot.slane %v128, %v132
    %v134 = vadd.f32 %v123, %v133
    %v135 = vmax.f32 %v134, 0.0
    %vm136 = vcmask 57344
    %137 = vst.msk [vmem:[#allocation3] sm:$0x1] %vm136, %v135
    // Predicated region
    $region22: #{simple_mlp_forward.1} parent=1 // pred_check
      _
    $region23: #{simple_mlp_forward.1} parent=1 // pred_check_branch
      %139 = sbr.rel (0) target = $region25
    $region24: #{simple_mlp_forward.1} parent=1 // pred_region
      %s141 = ssub.s32 16, 16
      %142 = vsyncadd [#allocation4], %s141
      %s144 = sshll.u32 [#allocation3], 4
      %s145 = int_to_ptr.vmem [resolvable:$true] %s144
      %147 = dma.vmem_to_hbm [thread:$0]  %s145, 16, %s5, [#allocation4]
    $region25: #{simple_mlp_forward.1} parent=1 // pred_fallthru
      _
    // Predicated region
    $region26: #{simple_mlp_forward.1} parent=1 // pred_check
      _
    $region27: #{simple_mlp_forward.1} parent=1 // pred_check_branch
      %149 = sbr.rel (0) target = $region29
    $region28: #{simple_mlp_forward.1} parent=1 // pred_region
      %150 = dma.done [#allocation4], 16
    $region29: #{simple_mlp_forward.1} parent=1 // pred_fallthru
      _
    %151 = vsyncpa [#allocation4], 1

</llo_original>
